<compile_context>
chip_gen: v7x
topology: tpu7x:2x2x1
jax: 0.10.0
libtpu: 0.0.40
codegen_flags: <defaults>
</compile_context>

<pallas_src>
import jax
import jax.numpy as jnp
from jax.experimental import pallas as pl
from jax.experimental.pallas import tpu as pltpu

LANES = 128


def _elementwise_kernel(x_ref,
                        add_ref, sub_ref, mul_ref, div_ref,
                        gt_ref, lt_ref, eq_ref):
    x = x_ref[...]
    add_ref[...] = x + 10.0
    sub_ref[...] = x - 5.0
    mul_ref[...] = x * 2.0
    div_ref[...] = x * 0.5          # bit-exact with x / 2 for f32 (0.5 is a power of two)
    gt_ref[...] = x > 5.0
    lt_ref[...] = x < 5.0
    eq_ref[...] = x == 5.0


def _tpu_config():
    """Per-generation (target_tile_rows, cores_per_chip, vmem_limit_bytes|None)."""
    kind = ""
    try:
        kind = jax.devices()[0].device_kind.lower()
    except Exception:
        pass
    if "v7" in kind or "tpu7" in kind:
        # ~23 MiB of double-buffered blocks; raise the scoped VMEM limit
        # explicitly (v7x physical VMEM is 64 MiB, scoped default 32 MiB).
        return 4096, 2, 48 * 1024 * 1024
    if "v6" in kind:
        # ~11.5 MiB double-buffered: fits the 32 MiB scoped default.
        return 2048, 1, None
    # v5e / v5p / unknown: ~5.9 MiB double-buffered fits the 16 MiB default.
    return 1024, 1, None


def _choose_tile_rows(rows_p, target, cores):
    """Tile rows: multiple of 32 (or full extent), >=2 grid steps on 2-core chips."""
    if rows_p <= target:
        if cores >= 2 and rows_p >= 64:
            # Split into >=2 blocks so both TensorCores (v7x) stream HBM.
            return ((rows_p // 2 + 31) // 32) * 32
        return rows_p                 # single full-extent block (always legal)
    return target                     # fixed 32-aligned tile; last block may be ragged


def pt_module_forward(x):
    """Reproduces PtModule.forward for a float32 tensor of any shape."""
    orig_shape = x.shape
    n_elem = x.size
    rows = pl.cdiv(n_elem, LANES)

    target_rows, cores, vmem_limit = _tpu_config()

    if n_elem % LANES == 0 and rows % 8 == 0:
        rows_p = rows                       # lane/sublane aligned: free reshape, no copy
    else:
        rows_p = ((rows + 31) // 32) * 32   # 32-row aligned slab (native int8/bool tile)
    needs_pad = rows_p * LANES != n_elem
    # TODO(synk): for the n_elem % 128 != 0 case, fold the ragged tail into the
    # kernel (SMEM length scalar + masked store) to avoid this full-tensor pad
    # copy; it is a cold path for typical NCHW shapes.
    if needs_pad:
        x2 = jnp.pad(x.reshape(-1), (0, rows_p * LANES - n_elem)).reshape(rows_p, LANES)
    else:
        x2 = x.reshape(rows_p, LANES)

    tile_rows = _choose_tile_rows(rows_p, target_rows, cores)
    grid = (pl.cdiv(rows_p, tile_rows),)

    block = pl.BlockSpec((tile_rows, LANES), lambda i: (i, 0))
    f32_out = jax.ShapeDtypeStruct((rows_p, LANES), jnp.float32)
    bool_out = jax.ShapeDtypeStruct((rows_p, LANES), jnp.bool_)

    cp_kwargs = dict(dimension_semantics=("parallel",))
    if vmem_limit is not None:
        cp_kwargs["vmem_limit_bytes"] = vmem_limit

    outs = pl.pallas_call(
        _elementwise_kernel,
        out_shape=(f32_out, f32_out, f32_out, f32_out,
                   bool_out, bool_out, bool_out),
        grid_spec=pl.GridSpec(
            grid=grid,
            in_specs=[block],
            out_specs=(block,) * 7,
        ),
        compiler_params=pltpu.CompilerParams(**cp_kwargs),
        cost_estimate=pl.CostEstimate(
            flops=7 * n_elem,
            transcendentals=0,
            # 1 f32 read + 4 f32 writes + 3 bool (int8) writes per element
            bytes_accessed=4 * n_elem + 4 * 4 * n_elem + 3 * n_elem,
        ),
    )(x2)

    if needs_pad:
        def _unflatten(a):
            return a.reshape(-1)[:n_elem].reshape(orig_shape)
    else:
        def _unflatten(a):
            return a.reshape(orig_shape)

    add_o, sub_o, mul_o, div_o, gt_o, lt_o, eq_o = outs
    return {
        'addition': _unflatten(add_o),
        'subtraction': _unflatten(sub_o),
        'multiplication': _unflatten(mul_o),
        'division': _unflatten(div_o),
        'greater_than': _unflatten(gt_o),
        'less_than': _unflatten(lt_o),
        'equal_to': _unflatten(eq_o),
    }


if __name__ == "__main__":
    key = jax.random.PRNGKey(0)
    # Small NCHW input; include integer-valued entries so `== 5` can fire.
    x = jax.random.randint(key, (2, 4, 16, 16), minval=0, maxval=11).astype(jnp.float32)

    out = pt_module_forward(x)
    jax.block_until_ready(out)

    # Reference check against plain JAX semantics (same as the PyTorch forward).
    assert jnp.allclose(out['addition'], x + 10)
    assert jnp.allclose(out['subtraction'], x - 5)
    assert jnp.allclose(out['multiplication'], x * 2)
    assert jnp.allclose(out['division'], x / 2)
    assert jnp.array_equal(out['greater_than'], x > 5)
    assert jnp.array_equal(out['less_than'], x < 5)
    assert jnp.array_equal(out['equal_to'], x == 5)

    print("KERNEL_OK")
</pallas_src>

<mosaic_0001>
module attributes {stable_mosaic.version = 11 : i64} {
  func.func @_elementwise_kernel(%arg0: i32, %arg1: memref<16x128xf32, #tpu.memory_space<vmem>>, %arg2: memref<16x128xf32, #tpu.memory_space<vmem>>, %arg3: memref<16x128xf32, #tpu.memory_space<vmem>>, %arg4: memref<16x128xf32, #tpu.memory_space<vmem>>, %arg5: memref<16x128xf32, #tpu.memory_space<vmem>>, %arg6: memref<16x128xi32, #tpu.memory_space<vmem>>, %arg7: memref<16x128xi32, #tpu.memory_space<vmem>>, %arg8: memref<16x128xi32, #tpu.memory_space<vmem>>) attributes {dimension_semantics = [#tpu.dimension_semantics<parallel>], iteration_bounds = array<i64: 1>, scalar_prefetch = 0 : i64, scratch_operands = 0 : i64, tpu.core_type = #tpu.core_type<tc>, window_params = [{transform_indices = @transform_0, window_bounds = array<i64: 16, 128>}, {transform_indices = @transform_1, window_bounds = array<i64: 16, 128>}, {transform_indices = @transform_2, window_bounds = array<i64: 16, 128>}, {transform_indices = @transform_3, window_bounds = array<i64: 16, 128>}, {transform_indices = @transform_4, window_bounds = array<i64: 16, 128>}, {transform_indices = @transform_5, window_bounds = array<i64: 16, 128>}, {transform_indices = @transform_6, window_bounds = array<i64: 16, 128>}, {transform_indices = @transform_7, window_bounds = array<i64: 16, 128>}]} {
    %c0 = arith.constant 0 : index
    %c0_0 = arith.constant 0 : index
    %0 = vector.load %arg1[%c0, %c0_0] : memref<16x128xf32, #tpu.memory_space<vmem>>, vector<16x128xf32>
    %cst = arith.constant 1.000000e+01 : f32
    %1 = vector.broadcast %cst : f32 to vector<16x128xf32>
    %2 = arith.addf %0, %1 : vector<16x128xf32>
    %c0_1 = arith.constant 0 : index
    %c0_2 = arith.constant 0 : index
    %3 = vector.load %arg2[%c0_1, %c0_2] : memref<16x128xf32, #tpu.memory_space<vmem>>, vector<16x128xf32>
    tpu.vector_store %arg2[%c0_1, %c0_2], %2 {strides = array<i32>} : memref<16x128xf32, #tpu.memory_space<vmem>>, vector<16x128xf32>,
    %cst_3 = arith.constant 5.000000e+00 : f32
    %4 = vector.broadcast %cst_3 : f32 to vector<16x128xf32>
    %5 = arith.subf %0, %4 : vector<16x128xf32>
    %c0_4 = arith.constant 0 : index
    %c0_5 = arith.constant 0 : index
    %6 = vector.load %arg3[%c0_4, %c0_5] : memref<16x128xf32, #tpu.memory_space<vmem>>, vector<16x128xf32>
    tpu.vector_store %arg3[%c0_4, %c0_5], %5 {strides = array<i32>} : memref<16x128xf32, #tpu.memory_space<vmem>>, vector<16x128xf32>,
    %cst_6 = arith.constant 2.000000e+00 : f32
    %7 = vector.broadcast %cst_6 : f32 to vector<16x128xf32>
    %8 = arith.mulf %0, %7 : vector<16x128xf32>
    %c0_7 = arith.constant 0 : index
    %c0_8 = arith.constant 0 : index
    %9 = vector.load %arg4[%c0_7, %c0_8] : memref<16x128xf32, #tpu.memory_space<vmem>>, vector<16x128xf32>
    tpu.vector_store %arg4[%c0_7, %c0_8], %8 {strides = array<i32>} : memref<16x128xf32, #tpu.memory_space<vmem>>, vector<16x128xf32>,
    %cst_9 = arith.constant 5.000000e-01 : f32
    %10 = vector.broadcast %cst_9 : f32 to vector<16x128xf32>
    %11 = arith.mulf %0, %10 : vector<16x128xf32>
    %c0_10 = arith.constant 0 : index
    %c0_11 = arith.constant 0 : index
    %12 = vector.load %arg5[%c0_10, %c0_11] : memref<16x128xf32, #tpu.memory_space<vmem>>, vector<16x128xf32>
    tpu.vector_store %arg5[%c0_10, %c0_11], %11 {strides = array<i32>} : memref<16x128xf32, #tpu.memory_space<vmem>>, vector<16x128xf32>,
    %cst_12 = arith.constant 5.000000e+00 : f32
    %13 = vector.broadcast %cst_12 : f32 to vector<16x128xf32>
    %14 = arith.cmpf ogt, %0, %13 : vector<16x128xf32>
    %c0_13 = arith.constant 0 : index
    %c0_14 = arith.constant 0 : index
    %15 = vector.load %arg6[%c0_13, %c0_14] : memref<16x128xi32, #tpu.memory_space<vmem>>, vector<16x128xi32>
    %16 = arith.extui %14 : vector<16x128xi1> to vector<16x128xi32>
    %cst_15 = arith.constant dense<0> : vector<16x128xi32>
    %17 = arith.cmpi ne, %15, %cst_15 : vector<16x128xi32>
    tpu.vector_store %arg6[%c0_13, %c0_14], %16 {strides = array<i32>} : memref<16x128xi32, #tpu.memory_space<vmem>>, vector<16x128xi32>,
    %cst_16 = arith.constant 5.000000e+00 : f32
    %18 = vector.broadcast %cst_16 : f32 to vector<16x128xf32>
    %19 = arith.cmpf olt, %0, %18 : vector<16x128xf32>
    %c0_17 = arith.constant 0 : index
    %c0_18 = arith.constant 0 : index
    %20 = vector.load %arg7[%c0_17, %c0_18] : memref<16x128xi32, #tpu.memory_space<vmem>>, vector<16x128xi32>
    %21 = arith.extui %19 : vector<16x128xi1> to vector<16x128xi32>
    %cst_19 = arith.constant dense<0> : vector<16x128xi32>
    %22 = arith.cmpi ne, %20, %cst_19 : vector<16x128xi32>
    tpu.vector_store %arg7[%c0_17, %c0_18], %21 {strides = array<i32>} : memref<16x128xi32, #tpu.memory_space<vmem>>, vector<16x128xi32>,
    %cst_20 = arith.constant 5.000000e+00 : f32
    %23 = vector.broadcast %cst_20 : f32 to vector<16x128xf32>
    %24 = arith.cmpf oeq, %0, %23 : vector<16x128xf32>
    %c0_21 = arith.constant 0 : index
    %c0_22 = arith.constant 0 : index
    %25 = vector.load %arg8[%c0_21, %c0_22] : memref<16x128xi32, #tpu.memory_space<vmem>>, vector<16x128xi32>
    %26 = arith.extui %24 : vector<16x128xi1> to vector<16x128xi32>
    %cst_23 = arith.constant dense<0> : vector<16x128xi32>
    %27 = arith.cmpi ne, %25, %cst_23 : vector<16x128xi32>
    tpu.vector_store %arg8[%c0_21, %c0_22], %26 {strides = array<i32>} : memref<16x128xi32, #tpu.memory_space<vmem>>, vector<16x128xi32>,
    return
  }
  func.func @transform_0(%arg0: i32) -> (i32, i32) {
    %c0_i32 = arith.constant 0 : i32
    %c0_i32_0 = arith.constant 0 : i32
    return %arg0, %c0_i32 : i32, i32
  }
  func.func @transform_1(%arg0: i32) -> (i32, i32) {
    %c0_i32 = arith.constant 0 : i32
    %c0_i32_0 = arith.constant 0 : i32
    return %arg0, %c0_i32 : i32, i32
  }
  func.func @transform_2(%arg0: i32) -> (i32, i32) {
    %c0_i32 = arith.constant 0 : i32
    %c0_i32_0 = arith.constant 0 : i32
    return %arg0, %c0_i32 : i32, i32
  }
  func.func @transform_3(%arg0: i32) -> (i32, i32) {
    %c0_i32 = arith.constant 0 : i32
    %c0_i32_0 = arith.constant 0 : i32
    return %arg0, %c0_i32 : i32, i32
  }
  func.func @transform_4(%arg0: i32) -> (i32, i32) {
    %c0_i32 = arith.constant 0 : i32
    %c0_i32_0 = arith.constant 0 : i32
    return %arg0, %c0_i32 : i32, i32
  }
  func.func @transform_5(%arg0: i32) -> (i32, i32) {
    %c0_i32 = arith.constant 0 : i32
    %c0_i32_0 = arith.constant 0 : i32
    return %arg0, %c0_i32 : i32, i32
  }
  func.func @transform_6(%arg0: i32) -> (i32, i32) {
    %c0_i32 = arith.constant 0 : i32
    %c0_i32_0 = arith.constant 0 : i32
    return %arg0, %c0_i32 : i32, i32
  }
  func.func @transform_7(%arg0: i32) -> (i32, i32) {
    %c0_i32 = arith.constant 0 : i32
    %c0_i32_0 = arith.constant 0 : i32
    return %arg0, %c0_i32 : i32, i32
  }
}

</mosaic_0001>

<llo_original>
// kernel: tpu_custom_call.1
$region0: #{tpu_custom_call.1}
  #allocation0 [shape = 'u32[]', space=smem, size = 0x4, offset = 0x4, fixed_abs, tag = 'smem constant byte address 0x4 - core index']
  #allocation1 [shape = 'u32[144,128]{1,0:T(1,128)}', space=vmem, size = 0x12000, scoped, tag = 'internal scratch']
  %s0 = inlined_call_operand.hbm [shape: f32[16,128], index: 0, kind: input, shape index: {}]
  %s1 = inlined_call_operand.hbm [shape: f32[16,128], index: 1, kind: output, shape index: {0}]
  %s2 = inlined_call_operand.hbm [shape: f32[16,128], index: 2, kind: output, shape index: {1}]
  %s3 = inlined_call_operand.hbm [shape: f32[16,128], index: 3, kind: output, shape index: {2}]
  %s4 = inlined_call_operand.hbm [shape: f32[16,128], index: 4, kind: output, shape index: {3}]
  %s5 = inlined_call_operand.vmem [shape: s32[16,128], index: 5, kind: output, shape index: {4}]
  %s6 = inlined_call_operand.vmem [shape: s32[16,128], index: 6, kind: output, shape index: {5}]
  %s7 = inlined_call_operand.vmem [shape: s32[16,128], index: 7, kind: output, shape index: {6}]
  %8 = xla_tuple %s1, %s2, %s3, %s4, %s5, %s6, %s7
  %s9 = sld [smem:[#allocation0]]
  $region66: #{tpu_custom_call.1} parent=0
    _
  %s11 = ssub.s32 1, %s9
  %s12 = scalar_select 0, %s11, %s9
  $region1: #{tpu_custom_call.1} parent=0
    #allocation2 [shape = 'u8[8192]{0}', space=vmem, size = 0x2000, scoped, tag = 'input window, operand 0, single buffered']
    #allocation3 [shape = 's32[1]{0}', space=sflag, size = 0x4, scoped, tag = 'scoped memory for tpu_custom_call.1']
    #allocation4 [shape = 's32[1]{0}', space=sflag, size = 0x4, scoped, tag = 'scoped memory for tpu_custom_call.1']
    #allocation5 [shape = 'u8[8192]{0}', space=vmem, size = 0x2000, scoped, tag = 'output window, operand 0, single buffered']
    #allocation6 [shape = 'u8[8192]{0}', space=vmem, size = 0x2000, scoped, tag = 'output window, operand 1, single buffered']
    #allocation7 [shape = 's32[1]{0}', space=sflag, size = 0x4, scoped, tag = 'scoped memory for tpu_custom_call.1']
    #allocation8 [shape = 'u8[8192]{0}', space=vmem, size = 0x2000, scoped, tag = 'output window, operand 2, single buffered']
    #allocation9 [shape = 'u8[8192]{0}', space=vmem, size = 0x2000, scoped, tag = 'output window, operand 3, single buffered']
    #allocation10 [shape = 's32[1]{0}', space=sflag, size = 0x4, scoped, tag = 'scoped memory for tpu_custom_call.1']
    %13 = vsyncpa [#allocation3], 0
    %14 = vsyncpa [#allocation4], 0
    %15 = vsyncpa [#allocation7], 0
    %16 = vsyncpa [#allocation10], 0
    // Predicated region
    $region2: #{tpu_custom_call.1} parent=1 // pred_check
      _
    $region3: #{tpu_custom_call.1} parent=1 // pred_check_branch
      %18 = sbr.rel (0) target = $region5
    $region4: #{tpu_custom_call.1} parent=1 // pred_region
      %s20 = ssub.s32 256, 256
      %21 = vsyncadd [#allocation3], %s20
      %s22 = sshll.u32 [#allocation2], 4
      %s23 = int_to_ptr.vmem [resolvable:$true] %s22
      %28 = dma.hbm_to_vmem [thread:$0]  %s0, 256, %s23, [#allocation3], 128, 128, 8
    $region5: #{tpu_custom_call.1} parent=1 // pred_fallthru
      _
    // Predicated region
    $region6: #{tpu_custom_call.1} parent=1 // pred_check
      _
    $region7: #{tpu_custom_call.1} parent=1 // pred_check_branch
      %30 = sbr.rel (0) target = $region9
    $region8: #{tpu_custom_call.1} parent=1 // pred_region
      %31 = dma.done [#allocation3], 256
    $region9: #{tpu_custom_call.1} parent=1 // pred_fallthru
      _
    %v32 = vld [vmem:[#allocation2] sm:$0xff]
    %v33 = vld [vmem:[#allocation2 + $0x8] sm:$0xff]
    %v34 = vadd.f32 %v32, 10.0
    %v35 = vadd.f32 %v33, 10.0
    %36 = vst [vmem:[#allocation5] sm:$0xff] %v34
    %37 = vst [vmem:[#allocation5 + $0x8] sm:$0xff] %v35
    %v38 = vsub.f32 %v32, 5.0
    %v39 = vsub.f32 %v33, 5.0
    %40 = vst [vmem:[#allocation6] sm:$0xff] %v38
    %41 = vst [vmem:[#allocation6 + $0x8] sm:$0xff] %v39
    %v42 = vmul.f32 %v32, 2.0
    %v43 = vmul.f32 %v33, 2.0
    %44 = vst [vmem:[#allocation8] sm:$0xff] %v42
    %45 = vst [vmem:[#allocation8 + $0x8] sm:$0xff] %v43
    %v46 = vmul.f32 %v32, 0.5
    %v47 = vmul.f32 %v33, 0.5
    %48 = vst [vmem:[#allocation9] sm:$0xff] %v46
    %49 = vst [vmem:[#allocation9 + $0x8] sm:$0xff] %v47
    %vm50 = vcmp.gt.f32.partialorder %v32, 5.0
    %vm51 = vcmp.gt.f32.partialorder %v33, 5.0
    %v52 = vsel %vm50, 1, 0
    %v53 = vsel %vm51, 1, 0
    %54 = vst [vmem:[%s5] sm:$0xff] %v52
    %55 = vst [vmem:[%s5 + $0x8] sm:$0xff] %v53
    %vm56 = vcmp.lt.f32.partialorder %v32, 5.0
    %vm57 = vcmp.lt.f32.partialorder %v33, 5.0
    %v58 = vsel %vm56, 1, 0
    %v59 = vsel %vm57, 1, 0
    %60 = vst [vmem:[%s6] sm:$0xff] %v58
    %61 = vst [vmem:[%s6 + $0x8] sm:$0xff] %v59
    %vm62 = vcmp.eq.f32.partialorder %v32, 5.0
    %vm63 = vcmp.eq.f32.partialorder %v33, 5.0
    %v64 = vsel %vm62, 1, 0
    %v65 = vsel %vm63, 1, 0
    %66 = vst [vmem:[%s7] sm:$0xff] %v64
    %67 = vst [vmem:[%s7 + $0x8] sm:$0xff] %v65
    // Predicated region
    $region10: #{tpu_custom_call.1} parent=1 // pred_check
      _
    $region11: #{tpu_custom_call.1} parent=1 // pred_check_branch
      %69 = sbr.rel (0) target = $region13
    $region12: #{tpu_custom_call.1} parent=1 // pred_region
      %s71 = ssub.s32 256, 256
      %72 = vsyncadd [#allocation4], %s71
      %s73 = sshll.u32 [#allocation5], 4
      %s74 = int_to_ptr.vmem [resolvable:$true] %s73
      %79 = dma.vmem_to_hbm [thread:$0]  %s74, 256, %s1, [#allocation4], 128, 128, 8
    $region13: #{tpu_custom_call.1} parent=1 // pred_fallthru
      _
    // Predicated region
    $region14: #{tpu_custom_call.1} parent=1 // pred_check
      _
    $region15: #{tpu_custom_call.1} parent=1 // pred_check_branch
      %81 = sbr.rel (0) target = $region17
    $region16: #{tpu_custom_call.1} parent=1 // pred_region
      %s83 = ssub.s32 256, 256
      %84 = vsyncadd [#allocation7], %s83
      %s85 = sshll.u32 [#allocation6], 4
      %s86 = int_to_ptr.vmem [resolvable:$true] %s85
      %91 = dma.vmem_to_hbm [thread:$0]  %s86, 256, %s2, [#allocation7], 128, 128, 8
    $region17: #{tpu_custom_call.1} parent=1 // pred_fallthru
      _
    // Predicated region
    $region18: #{tpu_custom_call.1} parent=1 // pred_check
      _
    $region19: #{tpu_custom_call.1} parent=1 // pred_check_branch
      %93 = sbr.rel (0) target = $region21
    $region20: #{tpu_custom_call.1} parent=1 // pred_region
      %s95 = ssub.s32 256, 256
      %96 = vsyncadd [#allocation7], %s95
      %s97 = sshll.u32 [#allocation8], 4
      %s98 = int_to_ptr.vmem [resolvable:$true] %s97
      %103 = dma.vmem_to_hbm [thread:$0]  %s98, 256, %s3, [#allocation7], 128, 128, 8
    $region21: #{tpu_custom_call.1} parent=1 // pred_fallthru
      _
    // Predicated region
    $region22: #{tpu_custom_call.1} parent=1 // pred_check
      _
    $region23: #{tpu_custom_call.1} parent=1 // pred_check_branch
      %105 = sbr.rel (0) target = $region25
    $region24: #{tpu_custom_call.1} parent=1 // pred_region
      %s107 = ssub.s32 256, 256
      %108 = vsyncadd [#allocation10], %s107
      %s109 = sshll.u32 [#allocation9], 4
      %s110 = int_to_ptr.vmem [resolvable:$true] %s109
      %115 = dma.vmem_to_hbm [thread:$0]  %s110, 256, %s4, [#allocation10], 128, 128, 8
    $region25: #{tpu_custom_call.1} parent=1 // pred_fallthru
      _
    // Predicated region
    $region26: #{tpu_custom_call.1} parent=1 // pred_check
      _
    $region27: #{tpu_custom_call.1} parent=1 // pred_check_branch
      %117 = sbr.rel (0) target = $region29
    $region28: #{tpu_custom_call.1} parent=1 // pred_region
      _
    $region29: #{tpu_custom_call.1} parent=1 // pred_fallthru
      _
    // Predicated region
    $region30: #{tpu_custom_call.1} parent=1 // pred_check
      _
    $region31: #{tpu_custom_call.1} parent=1 // pred_check_branch
      %119 = sbr.rel (0) target = $region33
    $region32: #{tpu_custom_call.1} parent=1 // pred_region
      _
    $region33: #{tpu_custom_call.1} parent=1 // pred_fallthru
      _
    // Predicated region
    $region34: #{tpu_custom_call.1} parent=1 // pred_check
      _
    $region35: #{tpu_custom_call.1} parent=1 // pred_check_branch
      %121 = sbr.rel (0) target = $region37
    $region36: #{tpu_custom_call.1} parent=1 // pred_region
      _
    $region37: #{tpu_custom_call.1} parent=1 // pred_fallthru
      _
    // Predicated region
    $region38: #{tpu_custom_call.1} parent=1 // pred_check
      _
    $region39: #{tpu_custom_call.1} parent=1 // pred_check_branch
      %123 = sbr.rel (0) target = $region41
    $region40: #{tpu_custom_call.1} parent=1 // pred_region
      %124 = dma.done [#allocation4], 256
    $region41: #{tpu_custom_call.1} parent=1 // pred_fallthru
      _
    // Predicated region
    $region42: #{tpu_custom_call.1} parent=1 // pred_check
      _
    $region43: #{tpu_custom_call.1} parent=1 // pred_check_branch
      %126 = sbr.rel (0) target = $region45
    $region44: #{tpu_custom_call.1} parent=1 // pred_region
      %127 = dma.done [#allocation7], 256
    $region45: #{tpu_custom_call.1} parent=1 // pred_fallthru
      _
    // Predicated region
    $region46: #{tpu_custom_call.1} parent=1 // pred_check
      _
    $region47: #{tpu_custom_call.1} parent=1 // pred_check_branch
      %129 = sbr.rel (0) target = $region49
    $region48: #{tpu_custom_call.1} parent=1 // pred_region
      %130 = dma.done [#allocation7], 256
    $region49: #{tpu_custom_call.1} parent=1 // pred_fallthru
      _
    // Predicated region
    $region50: #{tpu_custom_call.1} parent=1 // pred_check
      _
    $region51: #{tpu_custom_call.1} parent=1 // pred_check_branch
      %132 = sbr.rel (0) target = $region53
    $region52: #{tpu_custom_call.1} parent=1 // pred_region
      %133 = dma.done [#allocation10], 256
    $region53: #{tpu_custom_call.1} parent=1 // pred_fallthru
      _
    // Predicated region
    $region54: #{tpu_custom_call.1} parent=1 // pred_check
      _
    $region55: #{tpu_custom_call.1} parent=1 // pred_check_branch
      %135 = sbr.rel (0) target = $region57
    $region56: #{tpu_custom_call.1} parent=1 // pred_region
      _
    $region57: #{tpu_custom_call.1} parent=1 // pred_fallthru
      _
    // Predicated region
    $region58: #{tpu_custom_call.1} parent=1 // pred_check
      _
    $region59: #{tpu_custom_call.1} parent=1 // pred_check_branch
      %137 = sbr.rel (0) target = $region61
    $region60: #{tpu_custom_call.1} parent=1 // pred_region
      _
    $region61: #{tpu_custom_call.1} parent=1 // pred_fallthru
      _
    // Predicated region
    $region62: #{tpu_custom_call.1} parent=1 // pred_check
      _
    $region63: #{tpu_custom_call.1} parent=1 // pred_check_branch
      %139 = sbr.rel (0) target = $region65
    $region64: #{tpu_custom_call.1} parent=1 // pred_region
      _
    $region65: #{tpu_custom_call.1} parent=1 // pred_fallthru
      _
    %140 = vsyncpa [#allocation3], 1
    %141 = vsyncpa [#allocation4], 1
    %142 = vsyncpa [#allocation7], 1
    %143 = vsyncpa [#allocation10], 1

</llo_original>
